<compile_context>
chip_gen: v7x
topology: tpu7x:2x2x1
jax: 0.10.0
libtpu: 0.0.40
codegen_flags: <defaults>
</compile_context>

<pallas_src>
import numpy as np
import jax
import jax.numpy as jnp
from jax.experimental import pallas as pl
from jax.experimental.pallas import tpu as pltpu


# ----------------------------- Pallas kernel --------------------------------
def cnn_kernel(x_ref, a1_ref, b1_ref, r_ref, b2_ref, q2_ref, o_ref):
    cdt = r_ref.dtype                              # matmul operand dtype (bf16 or f32)

    # stage 1: Linear(4,256) + 1x1 conv0 + 3x3 conv1 + residual, fused -> ReLU
    x = x_ref[...].astype(cdt)                                            # (TB, 4)
    h1 = jnp.dot(x, a1_ref[...],
                 preferred_element_type=jnp.float32) + b1_ref[...]        # (TB, 1024) f32
    h1 = jnp.maximum(h1, 0.0)

    # stage 2: 2x2 avg-pool + 3x3 conv2 + residual, fused -> ReLU
    h2 = jnp.dot(h1.astype(cdt), r_ref[...],
                 preferred_element_type=jnp.float32) + b2_ref[...]        # (TB, 256) f32
    h2 = jnp.maximum(h2, 0.0)

    # stage 3: final 2x2 avg-pool + flatten as a (256, 64) matmul
    o_ref[...] = jnp.dot(h2.astype(cdt), q2_ref[...],
                         preferred_element_type=jnp.float32).astype(o_ref.dtype)


# ------------------------- offline fused-weight build ------------------------
def _shift_matrices(H, W):
    """S[k] @ X == X shifted by (di, dj) with zero padding, k = (di+1)*3+(dj+1)."""
    S = np.zeros((9, H * W, H * W), np.float32)
    for k, (di, dj) in enumerate((di, dj) for di in (-1, 0, 1) for dj in (-1, 0, 1)):
        for i in range(H):
            for j in range(W):
                ii, jj = i + di, j + dj
                if 0 <= ii < H and 0 <= jj < W:
                    S[k, i * W + j, ii * W + jj] = 1.0
    return S


def _pool_matrix(H, W):
    Ho, Wo = H // 2, W // 2
    P = np.zeros((Ho * Wo, H * W), np.float32)
    for oi in range(Ho):
        for oj in range(Wo):
            for a in range(2):
                for b in range(2):
                    P[oi * Wo + oj, (2 * oi + a) * W + (2 * oj + b)] = 0.25
    return P


def build_fused_mats(params, compute_dtype=jnp.bfloat16):
    """Fold the whole network (minus nonlinearities) into 3 matrices + 2 biases.

    Flat per-sample layout is (spatial, channel): index = s*64 + c.
    """
    Wfc, bfc, W0, b0, W1, b1, W2, b2 = params

    # front: Linear(4,256) fused with the 1x1 conv0 (16 -> 64 channels)
    W0m = W0[:, :, 0, 0]                                  # (64 co, 16 ci)
    Wfc_r = Wfc.reshape(16, 16, 4)                        # (ci, s, f)
    A = jnp.einsum('isf,oi->fso', Wfc_r, W0m).reshape(4, 1024)
    b0f = (jnp.einsum('is,oi->so', bfc.reshape(16, 16), W0m)
           + b0[None, :]).reshape(1, 1024)

    # 3x3 pad=1 convs as dense matrices on the flat (spatial, channel) layout
    S1 = jnp.asarray(_shift_matrices(4, 4))               # (9, 16, 16)
    S2 = jnp.asarray(_shift_matrices(2, 2))               # (9, 4, 4)
    W1k = jnp.transpose(W1, (2, 3, 1, 0)).reshape(9, 64, 64)
    W2k = jnp.transpose(W2, (2, 3, 1, 0)).reshape(9, 64, 64)
    M1 = jnp.einsum('kab,kcd->bcad', S1, W1k).reshape(1024, 1024)
    M2 = jnp.einsum('kab,kcd->bcad', S2, W2k).reshape(256, 256)
    b1f = jnp.tile(b1, 16).reshape(1, 1024)
    b2f = jnp.tile(b2, 4).reshape(1, 256)

    # 2x2 avg-pools as kron(P^T, I64)
    P1 = _pool_matrix(4, 4)                               # (4, 16)
    P2 = _pool_matrix(2, 2)                               # (1, 4)
    Q1 = jnp.asarray(np.kron(P1.T, np.eye(64, dtype=np.float32)))   # (1024, 256)
    Q2 = jnp.asarray(np.kron(P2.T, np.eye(64, dtype=np.float32)))   # (256, 64)

    # fold the Residual skip connections into the conv matrices (exact identity)
    M1r = M1 + jnp.eye(1024, dtype=jnp.float32)
    M2r = M2 + jnp.eye(256, dtype=jnp.float32)

    # collapse front+conv1 and pool1+conv2 into single matmuls
    A1 = A @ M1r                                          # (4, 1024)
    B1 = b0f @ M1r + b1f                                  # (1, 1024)  f32
    R = Q1 @ M2r                                          # (1024, 256)
    B2 = b2f                                              # (1, 256)   f32

    cdt = compute_dtype
    return (A1.astype(cdt), B1.astype(jnp.float32), R.astype(cdt),
            B2.astype(jnp.float32), Q2.astype(cdt))


# ---------------------------- glue / wrapper ---------------------------------
def _full_spec(shape):
    n = len(shape)
    return pl.BlockSpec(shape, lambda i, _n=n: (0,) * _n)


def cnn_forward(x, params, *, tb=512, compute_dtype=jnp.bfloat16, use_pallas=None):
    """x: (B, 1, 1, 4) float32 (NCHW-ish input of the PyTorch module).

    compute_dtype controls the MXU operand dtype (bf16 default; accumulation,
    bias adds and ReLU stay f32). compute_dtype=jnp.float32 matches the
    reference to ~1e-4.
    """
    B = x.shape[0]
    x2 = x.reshape(B, 4).astype(jnp.float32)              # torch.flatten(x, 1, 2)

    A1, B1, R, B2, Q2 = build_fused_mats(params, compute_dtype)

    if use_pallas is None:
        use_pallas = B >= 64
    if not use_pallas:
        # tiny-batch fallback: same fused matmul chain, plain XLA (no padding,
        # no launch/DMA-setup-dominated single grid step)
        h1 = jnp.maximum(jnp.dot(x2.astype(A1.dtype), A1,
                                 preferred_element_type=jnp.float32) + B1, 0.0)
        h2 = jnp.maximum(jnp.dot(h1.astype(R.dtype), R,
                                 preferred_element_type=jnp.float32) + B2, 0.0)
        return jnp.dot(h2.astype(Q2.dtype), Q2, preferred_element_type=jnp.float32)

    # --- batch blocking: TB samples per grid step (multiple of 8 sublanes) ----
    tb = max(8, (int(tb) // 8) * 8)
    # keep >= 2 grid steps whenever B allows it, so the "parallel" batch axis
    # can be split across v7x's two TensorCores (no effect on v5e/v6e beyond
    # slightly smaller tiles for mid-size batches).
    half = -(-B // 2)
    half = -(-half // 8) * 8
    tb = min(tb, max(8, half))
    Bp = -(-B // tb) * tb
    if Bp != B:
        x2 = jnp.pad(x2, ((0, Bp - B), (0, 0)))

    out = pl.pallas_call(
        cnn_kernel,
        out_shape=jax.ShapeDtypeStruct((Bp, 64), jnp.float32),
        grid_spec=pltpu.PrefetchScalarGridSpec(
            num_scalar_prefetch=0,
            grid=(Bp // tb,),
            in_specs=[
                pl.BlockSpec((tb, 4), lambda i: (i, 0)),   # x (batch-blocked)
                _full_spec((4, 1024)),                     # A1: front+conv1+residual
                _full_spec((1, 1024)),                     # B1
                _full_spec((1024, 256)),                   # R: pool1+conv2+residual
                _full_spec((1, 256)),                      # B2
                _full_spec((256, 64)),                     # Q2: pool2 / readout
            ],
            out_specs=pl.BlockSpec((tb, 64), lambda i: (i, 0)),
        ),
        compiler_params=pltpu.CompilerParams(
            dimension_semantics=("parallel",),
            vmem_limit_bytes=32 * 1024 * 1024),            # safe on v5e/v6e/v7x
    )(x2, A1, B1, R, B2, Q2)

    return out[:B]                                          # drop padded rows


# ----------------------- pure-JAX reference (for checking) -------------------
def cnn_reference(x, params):
    Wfc, bfc, W0, b0, W1, b1, W2, b2 = params
    B = x.shape[0]

    def conv(h, w, b, pad):
        y = jax.lax.conv_general_dilated(
            h, w, (1, 1), [(pad, pad), (pad, pad)],
            dimension_numbers=("NCHW", "OIHW", "NCHW"))
        return y + b[None, :, None, None]

    def avgpool(h):
        Bc, C, H, W = h.shape
        return h.reshape(Bc, C, H // 2, 2, W // 2, 2).mean(axis=(3, 5))

    h = x.reshape(B, 1, 4) @ Wfc.T + bfc                            # Linear(4, 256)
    h = h.reshape(B, 16, 4, 4)
    h = conv(h, W0, b0, 0)
    res = h
    h = conv(h, W1, b1, 1)
    h = jnp.maximum(h + res, 0.0)                                   # Residual + ReLU
    h = avgpool(h)
    res = h
    h = conv(h, W2, b2, 1)
    h = jnp.maximum(h + res, 0.0)                                   # Residual + ReLU
    h = avgpool(h)
    return h.reshape(B, -1)


# ---------------------------------- main --------------------------------------
if __name__ == "__main__":
    key = jax.random.PRNGKey(0)
    ks = jax.random.split(key, 9)

    # deterministic synthetic parameters (torch conventions / shapes)
    Wfc = 0.1 * jax.random.normal(ks[0], (256, 4), jnp.float32)     # Linear(4, 256)
    bfc = 0.1 * jax.random.normal(ks[1], (256,), jnp.float32)
    W0 = 0.1 * jax.random.normal(ks[2], (64, 16, 1, 1), jnp.float32)
    b0 = 0.1 * jax.random.normal(ks[3], (64,), jnp.float32)
    W1 = 0.1 * jax.random.normal(ks[4], (64, 64, 3, 3), jnp.float32)
    b1 = 0.1 * jax.random.normal(ks[5], (64,), jnp.float32)
    W2 = 0.1 * jax.random.normal(ks[6], (64, 64, 3, 3), jnp.float32)
    b2 = 0.1 * jax.random.normal(ks[7], (64,), jnp.float32)
    params = (Wfc, bfc, W0, b0, W1, b1, W2, b2)

    # input: (B, 1, 1, 4) so that flatten(1,2) -> (B, 1, 4) and the reshape to
    # (B, 16, 4, 4) after Linear(4, 256) is consistent with the module.
    x = jax.random.normal(ks[8], (2, 1, 1, 4), jnp.float32)

    ref = jax.block_until_ready(cnn_reference(x, params))

    # f32 compute path through the Pallas kernel: exact agreement with reference
    out_f32 = jax.block_until_ready(
        cnn_forward(x, params, compute_dtype=jnp.float32, use_pallas=True))
    np.testing.assert_allclose(np.asarray(out_f32), np.asarray(ref),
                               rtol=1e-4, atol=1e-4)

    # default bf16 MXU operands (f32 accumulation) through the Pallas kernel
    out_bf16 = jax.block_until_ready(cnn_forward(x, params, use_pallas=True))
    np.testing.assert_allclose(np.asarray(out_bf16), np.asarray(ref),
                               rtol=5e-2, atol=2e-2)

    print("KERNEL_OK")
</pallas_src>

<mosaic_0001>
module attributes {stable_mosaic.version = 11 : i64} {
  func.func @cnn_kernel(%arg0: i32, %arg1: memref<8x4xf32, #tpu.memory_space<vmem>>, %arg2: memref<4x1024xf32, #tpu.memory_space<vmem>>, %arg3: memref<1x1024xf32, #tpu.memory_space<vmem>>, %arg4: memref<1024x256xf32, #tpu.memory_space<vmem>>, %arg5: memref<1x256xf32, #tpu.memory_space<vmem>>, %arg6: memref<256x64xf32, #tpu.memory_space<vmem>>, %arg7: memref<8x64xf32, #tpu.memory_space<vmem>>) attributes {dimension_semantics = [#tpu.dimension_semantics<parallel>], iteration_bounds = array<i64: 1>, scalar_prefetch = 0 : i64, scratch_operands = 0 : i64, tpu.core_type = #tpu.core_type<tc>, window_params = [{transform_indices = @transform_0, window_bounds = array<i64: 8, 4>}, {pipeline_mode = #tpu.pipeline_mode<synchronous>, transform_indices = @transform_1, window_bounds = array<i64: 4, 1024>}, {pipeline_mode = #tpu.pipeline_mode<synchronous>, transform_indices = @transform_2, window_bounds = array<i64: 1, 1024>}, {pipeline_mode = #tpu.pipeline_mode<synchronous>, transform_indices = @transform_3, window_bounds = array<i64: 1024, 256>}, {pipeline_mode = #tpu.pipeline_mode<synchronous>, transform_indices = @transform_4, window_bounds = array<i64: 1, 256>}, {pipeline_mode = #tpu.pipeline_mode<synchronous>, transform_indices = @transform_5, window_bounds = array<i64: 256, 64>}, {transform_indices = @transform_6, window_bounds = array<i64: 8, 64>}]} {
    %c0 = arith.constant 0 : index
    %c0_0 = arith.constant 0 : index
    %0 = vector.load %arg1[%c0, %c0_0] : memref<8x4xf32, #tpu.memory_space<vmem>>, vector<8x4xf32>
    %c0_1 = arith.constant 0 : index
    %c0_2 = arith.constant 0 : index
    %1 = vector.load %arg2[%c0_1, %c0_2] : memref<4x1024xf32, #tpu.memory_space<vmem>>, vector<4x1024xf32>
    %cst = arith.constant dense<0.000000e+00> : vector<8x1024xf32>
    %2 = tpu.matmul %0, %1, %cst {dimension_numbers = #tpu.dot_dimension_numbers<[1], [0], [0], [1], [0, 0, 1, 1], [], []>} : vector<8x4xf32>, vector<4x1024xf32>, vector<8x1024xf32> -> vector<8x1024xf32>
    %c0_3 = arith.constant 0 : index
    %c0_4 = arith.constant 0 : index
    %3 = vector.load %arg3[%c0_3, %c0_4] : memref<1x1024xf32, #tpu.memory_space<vmem>>, vector<1x1024xf32>
    %4 = vector.broadcast %3 : vector<1x1024xf32> to vector<8x1024xf32>
    %5 = arith.addf %2, %4 : vector<8x1024xf32>
    %cst_5 = arith.constant 0.000000e+00 : f32
    %6 = vector.broadcast %cst_5 : f32 to vector<8x1024xf32>
    %7 = arith.maximumf %5, %6 : vector<8x1024xf32>
    %c0_6 = arith.constant 0 : index
    %c0_7 = arith.constant 0 : index
    %8 = vector.load %arg4[%c0_6, %c0_7] : memref<1024x256xf32, #tpu.memory_space<vmem>>, vector<1024x256xf32>
    %cst_8 = arith.constant dense<0.000000e+00> : vector<8x256xf32>
    %9 = tpu.matmul %7, %8, %cst_8 {dimension_numbers = #tpu.dot_dimension_numbers<[1], [0], [0], [1], [0, 0, 1, 1], [], []>} : vector<8x1024xf32>, vector<1024x256xf32>, vector<8x256xf32> -> vector<8x256xf32>
    %c0_9 = arith.constant 0 : index
    %c0_10 = arith.constant 0 : index
    %10 = vector.load %arg5[%c0_9, %c0_10] : memref<1x256xf32, #tpu.memory_space<vmem>>, vector<1x256xf32>
    %11 = vector.broadcast %10 : vector<1x256xf32> to vector<8x256xf32>
    %12 = arith.addf %9, %11 : vector<8x256xf32>
    %cst_11 = arith.constant 0.000000e+00 : f32
    %13 = vector.broadcast %cst_11 : f32 to vector<8x256xf32>
    %14 = arith.maximumf %12, %13 : vector<8x256xf32>
    %c0_12 = arith.constant 0 : index
    %c0_13 = arith.constant 0 : index
    %15 = vector.load %arg6[%c0_12, %c0_13] : memref<256x64xf32, #tpu.memory_space<vmem>>, vector<256x64xf32>
    %cst_14 = arith.constant dense<0.000000e+00> : vector<8x64xf32>
    %16 = tpu.matmul %14, %15, %cst_14 {dimension_numbers = #tpu.dot_dimension_numbers<[1], [0], [0], [1], [0, 0, 1, 1], [], []>} : vector<8x256xf32>, vector<256x64xf32>, vector<8x64xf32> -> vector<8x64xf32>
    %c0_15 = arith.constant 0 : index
    %c0_16 = arith.constant 0 : index
    %17 = vector.load %arg7[%c0_15, %c0_16] : memref<8x64xf32, #tpu.memory_space<vmem>>, vector<8x64xf32>
    tpu.vector_store %arg7[%c0_15, %c0_16], %16 {strides = array<i32>} : memref<8x64xf32, #tpu.memory_space<vmem>>, vector<8x64xf32>,
    return
  }
  func.func @transform_0(%arg0: i32) -> (i32, i32) {
    %c0_i32 = arith.constant 0 : i32
    %c0_i32_0 = arith.constant 0 : i32
    return %arg0, %c0_i32 : i32, i32
  }
  func.func @transform_1(%arg0: i32) -> (i32, i32) {
    %c0_i32 = arith.constant 0 : i32
    %c0_i32_0 = arith.constant 0 : i32
    %c0_i32_1 = arith.constant 0 : i32
    return %c0_i32, %c0_i32_0 : i32, i32
  }
  func.func @transform_2(%arg0: i32) -> (i32, i32) {
    %c0_i32 = arith.constant 0 : i32
    %c0_i32_0 = arith.constant 0 : i32
    %c0_i32_1 = arith.constant 0 : i32
    return %c0_i32, %c0_i32_0 : i32, i32
  }
  func.func @transform_3(%arg0: i32) -> (i32, i32) {
    %c0_i32 = arith.constant 0 : i32
    %c0_i32_0 = arith.constant 0 : i32
    %c0_i32_1 = arith.constant 0 : i32
    return %c0_i32, %c0_i32_0 : i32, i32
  }
  func.func @transform_4(%arg0: i32) -> (i32, i32) {
    %c0_i32 = arith.constant 0 : i32
    %c0_i32_0 = arith.constant 0 : i32
    %c0_i32_1 = arith.constant 0 : i32
    return %c0_i32, %c0_i32_0 : i32, i32
  }
  func.func @transform_5(%arg0: i32) -> (i32, i32) {
    %c0_i32 = arith.constant 0 : i32
    %c0_i32_0 = arith.constant 0 : i32
    %c0_i32_1 = arith.constant 0 : i32
    return %c0_i32, %c0_i32_0 : i32, i32
  }
  func.func @transform_6(%arg0: i32) -> (i32, i32) {
    %c0_i32 = arith.constant 0 : i32
    %c0_i32_0 = arith.constant 0 : i32
    return %arg0, %c0_i32 : i32, i32
  }
}

</mosaic_0001>

<llo_original>
// kernel: tpu_custom_call.1
$region0: #{tpu_custom_call.1}
  #allocation0 [shape = 'u32[]', space=smem, size = 0x4, offset = 0x4, fixed_abs, tag = 'smem constant byte address 0x4 - core index']
  #allocation1 [shape = 'u32[144,128]{1,0:T(1,128)}', space=vmem, size = 0x12000, scoped, tag = 'internal scratch']
  %s0 = inlined_call_operand.vmem [shape: f32[8,4], index: 0, kind: input, shape index: {}]
  %s1 = inlined_call_operand.vmem [shape: f32[4,1024], index: 1, kind: input, shape index: {}]
  %s2 = inlined_call_operand.vmem [shape: f32[1,1024], index: 2, kind: input, shape index: {}]
  %s3 = inlined_call_operand.hbm [shape: f32[1024,256], index: 3, kind: input, shape index: {}]
  %s4 = inlined_call_operand.vmem [shape: f32[1,256], index: 4, kind: input, shape index: {}]
  %s5 = inlined_call_operand.vmem [shape: f32[256,64], index: 5, kind: input, shape index: {}]
  %s6 = inlined_call_operand.hbm [shape: f32[8,64], index: 6, kind: output, shape index: {}]
  %s7 = sld [smem:[#allocation0]]
  $region38: #{tpu_custom_call.1} parent=0
    _
  %s9 = ssub.s32 1, %s7
  %s10 = scalar_select 0, %s9, %s7
  $region1: #{tpu_custom_call.1} parent=0
    #allocation2 [shape = 'u8[1048576]{0}', space=vmem, size = 0x100000, scoped, tag = 'input window, operand 3, single buffered']
    #allocation3 [shape = 's32[1]{0}', space=sflag, size = 0x4, scoped, tag = 'scoped memory for tpu_custom_call.1']
    #allocation4 [shape = 's32[1]{0}', space=sflag, size = 0x4, scoped, tag = 'scoped memory for tpu_custom_call.1']
    #allocation5 [shape = 'u8[4096]{0}', space=vmem, size = 0x1000, scoped, tag = 'output window, operand 0, single buffered']
    %11 = vsyncpa [#allocation3], 0
    %12 = vsyncpa [#allocation4], 0
    // Predicated region
    $region2: #{tpu_custom_call.1} parent=1 // pred_check
      _
    $region3: #{tpu_custom_call.1} parent=1 // pred_check_branch
      %14 = sbr.rel (0) target = $region5
    $region4: #{tpu_custom_call.1} parent=1 // pred_region
      _
    $region5: #{tpu_custom_call.1} parent=1 // pred_fallthru
      _
    // Predicated region
    $region6: #{tpu_custom_call.1} parent=1 // pred_check
      _
    $region7: #{tpu_custom_call.1} parent=1 // pred_check_branch
      %16 = sbr.rel (0) target = $region9
    $region8: #{tpu_custom_call.1} parent=1 // pred_region
      _
    $region9: #{tpu_custom_call.1} parent=1 // pred_fallthru
      _
    // Predicated region
    $region10: #{tpu_custom_call.1} parent=1 // pred_check
      _
    $region11: #{tpu_custom_call.1} parent=1 // pred_check_branch
      %18 = sbr.rel (0) target = $region13
    $region12: #{tpu_custom_call.1} parent=1 // pred_region
      _
    $region13: #{tpu_custom_call.1} parent=1 // pred_fallthru
      _
    // Predicated region
    $region14: #{tpu_custom_call.1} parent=1 // pred_check
      _
    $region15: #{tpu_custom_call.1} parent=1 // pred_check_branch
      %20 = sbr.rel (0) target = $region17
    $region16: #{tpu_custom_call.1} parent=1 // pred_region
      %s22 = ssub.s32 32768, 32768
      %23 = vsyncadd [#allocation3], %s22
      %s24 = sshll.u32 [#allocation2], 4
      %s25 = int_to_ptr.vmem [resolvable:$true] %s24
      %30 = dma.hbm_to_vmem [thread:$0]  %s3, 32768, %s25, [#allocation3], 256, 256, 16
    $region17: #{tpu_custom_call.1} parent=1 // pred_fallthru
      _
    // Predicated region
    $region18: #{tpu_custom_call.1} parent=1 // pred_check
      _
    $region19: #{tpu_custom_call.1} parent=1 // pred_check_branch
      %32 = sbr.rel (0) target = $region21
    $region20: #{tpu_custom_call.1} parent=1 // pred_region
      _
    $region21: #{tpu_custom_call.1} parent=1 // pred_fallthru
      _
    // Predicated region
    $region22: #{tpu_custom_call.1} parent=1 // pred_check
      _
    $region23: #{tpu_custom_call.1} parent=1 // pred_check_branch
      %34 = sbr.rel (0) target = $region25
    $region24: #{tpu_custom_call.1} parent=1 // pred_region
      _
    $region25: #{tpu_custom_call.1} parent=1 // pred_fallthru
      _
    // Predicated region
    $region26: #{tpu_custom_call.1} parent=1 // pred_check
      _
    $region27: #{tpu_custom_call.1} parent=1 // pred_check_branch
      %36 = sbr.rel (0) target = $region29
    $region28: #{tpu_custom_call.1} parent=1 // pred_region
      %37 = dma.done [#allocation3], 32768
    $region29: #{tpu_custom_call.1} parent=1 // pred_fallthru
      _
    %v38 = vld [vmem:[%s0] sm:$0xff]
    %v39 = vld [vmem:[%s1] sm:$0xff]
    %v40 = vld [vmem:[%s1 + $0x8] sm:$0xff]
    %v41 = vld [vmem:[%s1 + $0x10] sm:$0xff]
    %v42 = vld [vmem:[%s1 + $0x18] sm:$0xff]
    %v43 = vld [vmem:[%s2] sm:$0xff]
    %v45 = vlaneseq
    %v46 = vshrl.u32 %v45, 7
    %v47 = vsub.s32 0, %v46
    %v48 = vrot.slane %v43, %v47
    %v49 = vlaneseq
    %v50 = vshrl.u32 %v49, 7
    %v51 = vsub.s32 1, %v50
    %v52 = vrot.slane %v43, %v51
    %v53 = vlaneseq
    %v54 = vshrl.u32 %v53, 7
    %v55 = vsub.s32 2, %v54
    %v56 = vrot.slane %v43, %v55
    %v57 = vlaneseq
    %v58 = vshrl.u32 %v57, 7
    %v59 = vsub.s32 3, %v58
    %v60 = vrot.slane %v43, %v59
    %v61 = vlaneseq
    %v62 = vshrl.u32 %v61, 7
    %v63 = vsub.s32 4, %v62
    %v64 = vrot.slane %v43, %v63
    %v65 = vlaneseq
    %v66 = vshrl.u32 %v65, 7
    %v67 = vsub.s32 5, %v66
    %v68 = vrot.slane %v43, %v67
    %v69 = vlaneseq
    %v70 = vshrl.u32 %v69, 7
    %v71 = vsub.s32 6, %v70
    %v72 = vrot.slane %v43, %v71
    %v73 = vlaneseq
    %v74 = vshrl.u32 %v73, 7
    %v75 = vsub.s32 7, %v74
    %v76 = vrot.slane %v43, %v75
    %v89 = vcombine.high %v39, %v39
    %v90 = vcombine.high %v40, %v40
    %v91 = vcombine.high %v41, %v41
    %v92 = vcombine.high %v42, %v42
    %vm93 = vcmask 31744
    %v95 = vsel %vm93, %v38, 0
    %vm97 = vcmask 1043456
    %v98 = vsel %vm97, %v39, 0
    %v100 = vsel %vm97, %v89, 0
    %v102 = vsel %vm97, %v40, 0
    %v104 = vsel %vm97, %v90, 0
    %v106 = vsel %vm97, %v41, 0
    %v108 = vsel %vm97, %v91, 0
    %v110 = vsel %vm97, %v42, 0
    %v112 = vsel %vm97, %v92, 0
    %114 = vmatprep.subr.mxu0 %v100
    %115 = vmatpush1.msra.mxu0 %v98
    %116 = vmatprep.subr.mxu0 0.0
    %117 = vmatpush1.msra.mxu0 0.0
    %118 = vmatprep.subr.mxu0 0.0
    %119 = vmatpush1.msra.mxu0 0.0
    %120 = vmatprep.subr.mxu0 0.0
    %121 = vmatpush1.msra.mxu0 0.0
    %122 = vmatprep.subr.mxu0 0.0
    %123 = vmatpush1.msra.mxu0 0.0
    %124 = vmatprep.subr.mxu0 0.0
    %125 = vmatpush1.msra.mxu0 0.0
    %126 = vmatprep.subr.mxu0 0.0
    %127 = vmatpush1.msra.mxu0 0.0
    %128 = vmatprep.subr.mxu0 0.0
    %129 = vmatpush1.msra.mxu0 0.0
    %130 = vmatprep.subr.mxu0 0.0
    %131 = vmatpush1.msra.mxu0 0.0
    %132 = vmatprep.subr.mxu0 0.0
    %133 = vmatpush1.msra.mxu0 0.0
    %134 = vmatprep.subr.mxu0 0.0
    %135 = vmatpush1.msra.mxu0 0.0
    %136 = vmatprep.subr.mxu0 0.0
    %137 = vmatpush1.msra.mxu0 0.0
    %138 = vmatprep.subr.mxu0 0.0
    %139 = vmatpush1.msra.mxu0 0.0
    %140 = vmatprep.subr.mxu0 0.0
    %141 = vmatpush1.msra.mxu0 0.0
    %142 = vmatprep.subr.mxu0 0.0
    %143 = vmatpush1.msra.mxu0 0.0
    %144 = vmatprep.subr.mxu0 0.0
    %145 = vmatpush1.msra.mxu0 0.0
    %146 = vmatprep.subr.mxu0 0.0
    %147 = vmatpush1.msra.mxu0 0.0
    %148 = vmatprep.subr.mxu0 0.0
    %149 = vmatpush1.msra.mxu0 0.0
    %150 = vmatprep.subr.mxu0 0.0
    %151 = vmatpush1.msra.mxu0 0.0
    %152 = vmatprep.subr.mxu0 0.0
    %153 = vmatpush1.msra.mxu0 0.0
    %154 = vmatprep.subr.mxu0 0.0
    %155 = vmatpush1.msra.mxu0 0.0
    %156 = vmatprep.subr.mxu0 0.0
    %157 = vmatpush1.msra.mxu0 0.0
    %158 = vmatprep.subr.mxu0 0.0
    %159 = vmatpush1.msra.mxu0 0.0
    %160 = vmatprep.subr.mxu0 0.0
    %161 = vmatpush1.msra.mxu0 0.0
    %162 = vmatprep.subr.mxu0 0.0
    %163 = vmatpush1.msra.mxu0 0.0
    %164 = vmatprep.subr.mxu0 0.0
    %165 = vmatpush1.msra.mxu0 0.0
    %166 = vmatprep.subr.mxu0 0.0
    %167 = vmatpush1.msra.mxu0 0.0
    %168 = vmatprep.subr.mxu0 0.0
    %169 = vmatpush1.msra.mxu0 0.0
    %170 = vmatprep.subr.mxu0 0.0
    %171 = vmatpush1.msra.mxu0 0.0
    %172 = vmatprep.subr.mxu0 0.0
    %173 = vmatpush1.msra.mxu0 0.0
    %174 = vmatprep.subr.mxu0 0.0
    %175 = vmatpush1.msra.mxu0 0.0
    %176 = vmatprep.subr.mxu0 0.0
    %177 = vmatpush1.msra.mxu0 0.0
    %178 = vmatprep.mubr.f32.mxu0 0.0
    %179 = vmatmul.mubr.f32.gmra.mrb[0].mxu0 %v95
    %v180 = vpop.f32.mrb[0].mxu0
    %v181 = vadd.f32 %v48, %v180
    %v182 = vpop.f32.mrb[0].mxu0
    %v183 = vadd.f32 %v52, %v182
    %184 = vdwg.mxu0
    %185 = vmatprep.subr.mxu0 %v104
    %186 = vmatpush1.msra.mxu0 %v102
    %187 = vmatprep.subr.mxu0 0.0
    %188 = vmatpush1.msra.mxu0 0.0
    %189 = vmatprep.subr.mxu0 0.0
    %190 = vmatpush1.msra.mxu0 0.0
    %191 = vmatprep.subr.mxu0 0.0
    %192 = vmatpush1.msra.mxu0 0.0
    %193 = vmatprep.subr.mxu0 0.0
    %194 = vmatpush1.msra.mxu0 0.0
    %195 = vmatprep.subr.mxu0 0.0
    %196 = vmatpush1.msra.mxu0 0.0
    %197 = vmatprep.subr.mxu0 0.0
    %198 = vmatpush1.msra.mxu0 0.0
    %199 = vmatprep.subr.mxu0 0.0
    %200 = vmatpush1.msra.mxu0 0.0
    %201 = vmatprep.subr.mxu0 0.0
    %202 = vmatpush1.msra.mxu0 0.0
    %203 = vmatprep.subr.mxu0 0.0
    %204 = vmatpush1.msra.mxu0 0.0
    %205 = vmatprep.subr.mxu0 0.0
    %206 = vmatpush1.msra.mxu0 0.0
    %207 = vmatprep.subr.mxu0 0.0
    %208 = vmatpush1.msra.mxu0 0.0
    %209 = vmatprep.subr.mxu0 0.0
    %210 = vmatpush1.msra.mxu0 0.0
    %211 = vmatprep.subr.mxu0 0.0
    %212 = vmatpush1.msra.mxu0 0.0
    %213 = vmatprep.subr.mxu0 0.0
    %214 = vmatpush1.msra.mxu0 0.0
    %215 = vmatprep.subr.mxu0 0.0
    %216 = vmatpush1.msra.mxu0 0.0
    %217 = vmatprep.subr.mxu0 0.0
    %218 = vmatpush1.msra.mxu0 0.0
    %219 = vmatprep.subr.mxu0 0.0
    %220 = vmatpush1.msra.mxu0 0.0
    %221 = vmatprep.subr.mxu0 0.0
    %222 = vmatpush1.msra.mxu0 0.0
    %223 = vmatprep.subr.mxu0 0.0
    %224 = vmatpush1.msra.mxu0 0.0
    %225 = vmatprep.subr.mxu0 0.0
    %226 = vmatpush1.msra.mxu0 0.0
    %227 = vmatprep.subr.mxu0 0.0
    %228 = vmatpush1.msra.mxu0 0.0
    %229 = vmatprep.subr.mxu0 0.0
    %230 = vmatpush1.msra.mxu0 0.0
    %231 = vmatprep.subr.mxu0 0.0
    %232 = vmatpush1.msra.mxu0 0.0
    %233 = vmatprep.subr.mxu0 0.0
    %234 = vmatpush1.msra.mxu0 0.0
    %235 = vmatprep.subr.mxu0 0.0
    %236 = vmatpush1.msra.mxu0 0.0
    %237 = vmatprep.subr.mxu0 0.0
    %238 = vmatpush1.msra.mxu0 0.0
    %239 = vmatprep.subr.mxu0 0.0
    %240 = vmatpush1.msra.mxu0 0.0
    %241 = vmatprep.subr.mxu0 0.0
    %242 = vmatpush1.msra.mxu0 0.0
    %243 = vmatprep.subr.mxu0 0.0
    %244 = vmatpush1.msra.mxu0 0.0
    %245 = vmatprep.subr.mxu0 0.0
    %246 = vmatpush1.msra.mxu0 0.0
    %247 = vmatprep.subr.mxu0 0.0
    %248 = vmatpush1.msra.mxu0 0.0
    %249 = vmatprep.mubr.f32.mxu0 0.0
    %250 = vmatmul.mubr.f32.gmra.mrb[0].mxu0 %v95
    %v251 = vpop.f32.mrb[0].mxu0
    %v252 = vadd.f32 %v56, %v251
    %v253 = vpop.f32.mrb[0].mxu0
    %v254 = vadd.f32 %v60, %v253
    %255 = vdwg.mxu0
    %256 = vmatprep.subr.mxu0 %v108
    %257 = vmatpush1.msra.mxu0 %v106
    %258 = vmatprep.subr.mxu0 0.0
    %259 = vmatpush1.msra.mxu0 0.0
    %260 = vmatprep.subr.mxu0 0.0
    %261 = vmatpush1.msra.mxu0 0.0
    %262 = vmatprep.subr.mxu0 0.0
    %263 = vmatpush1.msra.mxu0 0.0
    %264 = vmatprep.subr.mxu0 0.0
    %265 = vmatpush1.msra.mxu0 0.0
    %266 = vmatprep.subr.mxu0 0.0
    %267 = vmatpush1.msra.mxu0 0.0
    %268 = vmatprep.subr.mxu0 0.0
    %269 = vmatpush1.msra.mxu0 0.0
    %270 = vmatprep.subr.mxu0 0.0
    %271 = vmatpush1.msra.mxu0 0.0
    %272 = vmatprep.subr.mxu0 0.0
    %273 = vmatpush1.msra.mxu0 0.0
    %274 = vmatprep.subr.mxu0 0.0
    %275 = vmatpush1.msra.mxu0 0.0
    %276 = vmatprep.subr.mxu0 0.0
    %277 = vmatpush1.msra.mxu0 0.0
    %278 = vmatprep.subr.mxu0 0.0
    %279 = vmatpush1.msra.mxu0 0.0
    %280 = vmatprep.subr.mxu0 0.0
    %281 = vmatpush1.msra.mxu0 0.0
    %282 = vmatprep.subr.mxu0 0.0
    %283 = vmatpush1.msra.mxu0 0.0
    %284 = vmatprep.subr.mxu0 0.0
    %285 = vmatpush1.msra.mxu0 0.0
    %286 = vmatprep.subr.mxu0 0.0
    %287 = vmatpush1.msra.mxu0 0.0
    %288 = vmatprep.subr.mxu0 0.0
    %289 = vmatpush1.msra.mxu0 0.0
    %290 = vmatprep.subr.mxu0 0.0
    %291 = vmatpush1.msra.mxu0 0.0
    %292 = vmatprep.subr.mxu0 0.0
    %293 = vmatpush1.msra.mxu0 0.0
    %294 = vmatprep.subr.mxu0 0.0
    %295 = vmatpush1.msra.mxu0 0.0
    %296 = vmatprep.subr.mxu0 0.0
    %297 = vmatpush1.msra.mxu0 0.0
    %298 = vmatprep.subr.mxu0 0.0
    %299 = vmatpush1.msra.mxu0 0.0
    %300 = vmatprep.subr.mxu0 0.0
    %301 = vmatpush1.msra.mxu0 0.0
    %302 = vmatprep.subr.mxu0 0.0
    %303 = vmatpush1.msra.mxu0 0.0
    %304 = vmatprep.subr.mxu0 0.0
    %305 = vmatpush1.msra.mxu0 0.0
    %306 = vmatprep.subr.mxu0 0.0
    %307 = vmatpush1.msra.mxu0 0.0
    %308 = vmatprep.subr.mxu0 0.0
    %309 = vmatpush1.msra.mxu0 0.0
    %310 = vmatprep.subr.mxu0 0.0
    %311 = vmatpush1.msra.mxu0 0.0
    %312 = vmatprep.subr.mxu0 0.0
    %313 = vmatpush1.msra.mxu0 0.0
    %314 = vmatprep.subr.mxu0 0.0
    %315 = vmatpush1.msra.mxu0 0.0
    %316 = vmatprep.subr.mxu0 0.0
    %317 = vmatpush1.msra.mxu0 0.0
    %318 = vmatprep.subr.mxu0 0.0
    %319 = vmatpush1.msra.mxu0 0.0
    %320 = vmatprep.mubr.f32.mxu0 0.0
    %321 = vmatmul.mubr.f32.gmra.mrb[0].mxu0 %v95
    %v322 = vpop.f32.mrb[0].mxu0
    %v323 = vadd.f32 %v64, %v322
    %v324 = vpop.f32.mrb[0].mxu0
    %v325 = vadd.f32 %v68, %v324
    %326 = vdwg.mxu0
    %327 = vmatprep.subr.mxu0 %v112
    %328 = vmatpush1.msra.mxu0 %v110
    %329 = vmatprep.subr.mxu0 0.0
    %330 = vmatpush1.msra.mxu0 0.0
    %331 = vmatprep.subr.mxu0 0.0
    %332 = vmatpush1.msra.mxu0 0.0
    %333 = vmatprep.subr.mxu0 0.0
    %334 = vmatpush1.msra.mxu0 0.0
    %335 = vmatprep.subr.mxu0 0.0
    %336 = vmatpush1.msra.mxu0 0.0
    %337 = vmatprep.subr.mxu0 0.0
    %338 = vmatpush1.msra.mxu0 0.0
    %339 = vmatprep.subr.mxu0 0.0
    %340 = vmatpush1.msra.mxu0 0.0
    %341 = vmatprep.subr.mxu0 0.0
    %342 = vmatpush1.msra.mxu0 0.0
    %343 = vmatprep.subr.mxu0 0.0
    %344 = vmatpush1.msra.mxu0 0.0
    %345 = vmatprep.subr.mxu0 0.0
    %346 = vmatpush1.msra.mxu0 0.0
    %347 = vmatprep.subr.mxu0 0.0
    %348 = vmatpush1.msra.mxu0 0.0
    %349 = vmatprep.subr.mxu0 0.0
    %350 = vmatpush1.msra.mxu0 0.0
    %351 = vmatprep.subr.mxu0 0.0
    %352 = vmatpush1.msra.mxu0 0.0
    %353 = vmatprep.subr.mxu0 0.0
    %354 = vmatpush1.msra.mxu0 0.0
    %355 = vmatprep.subr.mxu0 0.0
    %356 = vmatpush1.msra.mxu0 0.0
    %357 = vmatprep.subr.mxu0 0.0
    %358 = vmatpush1.msra.mxu0 0.0
    %359 = vmatprep.subr.mxu0 0.0
    %360 = vmatpush1.msra.mxu0 0.0
    %361 = vmatprep.subr.mxu0 0.0
    %362 = vmatpush1.msra.mxu0 0.0
    %363 = vmatprep.subr.mxu0 0.0
    %364 = vmatpush1.msra.mxu0 0.0
    %365 = vmatprep.subr.mxu0 0.0
    %366 = vmatpush1.msra.mxu0 0.0
    %367 = vmatprep.subr.mxu0 0.0
    %368 = vmatpush1.msra.mxu0 0.0
    %369 = vmatprep.subr.mxu0 0.0
    %370 = vmatpush1.msra.mxu0 0.0
    %371 = vmatprep.subr.mxu0 0.0
    %372 = vmatpush1.msra.mxu0 0.0
    %373 = vmatprep.subr.mxu0 0.0
    %374 = vmatpush1.msra.mxu0 0.0
    %375 = vmatprep.subr.mxu0 0.0
    %376 = vmatpush1.msra.mxu0 0.0
    %377 = vmatprep.subr.mxu0 0.0
    %378 = vmatpush1.msra.mxu0 0.0
    %379 = vmatprep.subr.mxu0 0.0
    %380 = vmatpush1.msra.mxu0 0.0
    %381 = vmatprep.subr.mxu0 0.0
    %382 = vmatpush1.msra.mxu0 0.0
    %383 = vmatprep.subr.mxu0 0.0
    %384 = vmatpush1.msra.mxu0 0.0
    %385 = vmatprep.subr.mxu0 0.0
    %386 = vmatpush1.msra.mxu0 0.0
    %387 = vmatprep.subr.mxu0 0.0
    %388 = vmatpush1.msra.mxu0 0.0
    %389 = vmatprep.subr.mxu0 0.0
    %390 = vmatpush1.msra.mxu0 0.0
    %391 = vmatprep.mubr.f32.mxu0 0.0
    %392 = vmatmul.mubr.f32.gmra.mrb[0].mxu0 %v95
    %v393 = vpop.f32.mrb[0].mxu0
    %v394 = vadd.f32 %v72, %v393
    %v395 = vpop.f32.mrb[0].mxu0
    %v396 = vadd.f32 %v76, %v395
    %397 = vdwg.mxu0
    %v398 = vmax.f32 %v181, 0.0
    %v399 = vmax.f32 %v183, 0.0
    %v400 = vmax.f32 %v252, 0.0
    %v401 = vmax.f32 %v254, 0.0
    %v402 = vmax.f32 %v323, 0.0
    %v403 = vmax.f32 %v325, 0.0
    %v404 = vmax.f32 %v394, 0.0
    %v405 = vmax.f32 %v396, 0.0
    %v406 = vld [vmem:[#allocation2] sm:$0xff]
    %v407 = vld [vmem:[#allocation2 + $0x8] sm:$0xff]
    %v408 = vld [vmem:[#allocation2 + $0x10] sm:$0xff]
    %v409 = vld [vmem:[#allocation2 + $0x18] sm:$0xff]
    %v410 = vld [vmem:[#allocation2 + $0x20] sm:$0xff]
    %v411 = vld [vmem:[#allocation2 + $0x28] sm:$0xff]
    %v412 = vld [vmem:[#allocation2 + $0x30] sm:$0xff]
    %v413 = vld [vmem:[#allocation2 + $0x38] sm:$0xff]
    %v414 = vld [vmem:[#allocation2 + $0x40] sm:$0xff]
    %v415 = vld [vmem:[#allocation2 + $0x48] sm:$0xff]
    %v416 = vld [vmem:[#allocation2 + $0x50] sm:$0xff]
    %v417 = vld [vmem:[#allocation2 + $0x58] sm:$0xff]
    %v418 = vld [vmem:[#allocation2 + $0x60] sm:$0xff]
    %v419 = vld [vmem:[#allocation2 + $0x68] sm:$0xff]
    %v420 = vld [vmem:[#allocation2 + $0x70] sm:$0xff]
    %v421 = vld [vmem:[#allocation2 + $0x78] sm:$0xff]
    %v422 = vld [vmem:[#allocation2 + $0x80] sm:$0xff]
    %v423 = vld [vmem:[#allocation2 + $0x88] sm:$0xff]
    %v424 = vld [vmem:[#allocation2 + $0x90] sm:$0xff]
    %v425 = vld [vmem:[#allocation2 + $0x98] sm:$0xff]
    %v426 = vld [vmem:[#allocation2 + $0xa0] sm:$0xff]
    %v427 = vld [vmem:[#allocation2 + $0xa8] sm:$0xff]
    %v428 = vld [vmem:[#allocation2 + $0xb0] sm:$0xff]
    %v429 = vld [vmem:[#allocation2 + $0xb8] sm:$0xff]
    %v430 = vld [vmem:[#allocation2 + $0xc0] sm:$0xff]
    %v431 = vld [vmem:[#allocation2 + $0xc8] sm:$0xff]
    %v432 = vld [vmem:[#allocation2 + $0xd0] sm:$0xff]
    %v433 = vld [vmem:[#allocation2 + $0xd8] sm:$0xff]
    %v434 = vld [vmem:[#allocation2 + $0xe0] sm:$0xff]
    %v435 = vld [vmem:[#allocation2 + $0xe8] sm:$0xff]
    %v436 = vld [vmem:[#allocation2 + $0xf0] sm:$0xff]
    %v437 = vld [vmem:[#allocation2 + $0xf8] sm:$0xff]
    %v438 = vld [vmem:[#allocation2 + $0x100] sm:$0xff]
    %v439 = vld [vmem:[#allocation2 + $0x108] sm:$0xff]
    %v440 = vld [vmem:[#allocation2 + $0x110] sm:$0xff]
    %v441 = vld [vmem:[#allocation2 + $0x118] sm:$0xff]
    %v442 = vld [vmem:[#allocation2 + $0x120] sm:$0xff]
    %v443 = vld [vmem:[#allocation2 + $0x128] sm:$0xff]
    %v444 = vld [vmem:[#allocation2 + $0x130] sm:$0xff]
    %v445 = vld [vmem:[#allocation2 + $0x138] sm:$0xff]
    %v446 = vld [vmem:[#allocation2 + $0x140] sm:$0xff]
    %v447 = vld [vmem:[#allocation2 + $0x148] sm:$0xff]
    %v448 = vld [vmem:[#allocation2 + $0x150] sm:$0xff]
    %v449 = vld [vmem:[#allocation2 + $0x158] sm:$0xff]
    %v450 = vld [vmem:[#allocation2 + $0x160] sm:$0xff]
    %v451 = vld [vmem:[#allocation2 + $0x168] sm:$0xff]
    %v452 = vld [vmem:[#allocation2 + $0x170] sm:$0xff]
    %v453 = vld [vmem:[#allocation2 + $0x178] sm:$0xff]
    %v454 = vld [vmem:[#allocation2 + $0x180] sm:$0xff]
    %v455 = vld [vmem:[#allocation2 + $0x188] sm:$0xff]
    %v456 = vld [vmem:[#allocation2 + $0x190] sm:$0xff]
    %v457 = vld [vmem:[#allocation2 + $0x198] sm:$0xff]
    %v458 = vld [vmem:[#allocation2 + $0x1a0] sm:$0xff]
    %v459 = vld [vmem:[#allocation2 + $0x1a8] sm:$0xff]
    %v460 = vld [vmem:[#allocation2 + $0x1b0] sm:$0xff]
    %v461 = vld [vmem:[#allocation2 + $0x1b8] sm:$0xff]
    %v462 = vld [vmem:[#allocation2 + $0x1c0] sm:$0xff]
    %v463 = vld [vmem:[#allocation2 + $0x1c8] sm:$0xff]
    %v464 = vld [vmem:[#allocation2 + $0x1d0] sm:$0xff]
    %v465 = vld [vmem:[#allocation2 + $0x1d8] sm:$0xff]
    %v466 = vld [vmem:[#allocation2 + $0x1e0] sm:$0xff]
    %v467 = vld [vmem:[#allocation2 + $0x1e8] sm:$0xff]
    %v468 = vld [vmem:[#allocation2 + $0x1f0] sm:$0xff]
    %v469 = vld [vmem:[#allocation2 + $0x1f8] sm:$0xff]
    %v470 = vld [vmem:[#allocation2 + $0x200] sm:$0xff]
    %v471 = vld [vmem:[#allocation2 + $0x208] sm:$0xff]
    %v472 = vld [vmem:[#allocation2 + $0x210] sm:$0xff]
    %v473 = vld [vmem:[#allocation2 + $0x218] sm:$0xff]
    %v474 = vld [vmem:[#allocation2 + $0x220] sm:$0xff]
    %v475 = vld [vmem:[#allocation2 + $0x228] sm:$0xff]
    %v476 = vld [vmem:[#allocation2 + $0x230] sm:$0xff]
    %v477 = vld [vmem:[#allocation2 + $0x238] sm:$0xff]
    %v478 = vld [vmem:[#allocation2 + $0x240] sm:$0xff]
    %v479 = vld [vmem:[#allocation2 + $0x248] sm:$0xff]
    %v480 = vld [vmem:[#allocation2 + $0x250] sm:$0xff]
    %v481 = vld [vmem:[#allocation2 + $0x258] sm:$0xff]
    %v482 = vld [vmem:[#allocation2 + $0x260] sm:$0xff]
    %v483 = vld [vmem:[#allocation2 + $0x268] sm:$0xff]
    %v484 = vld [vmem:[#allocation2 + $0x270] sm:$0xff]
    %v485 = vld [vmem:[#allocation2 + $0x278] sm:$0xff]
    %v486 = vld [vmem:[#allocation2 + $0x280] sm:$0xff]
    %v487 = vld [vmem:[#allocation2 + $0x288] sm:$0xff]
    %v488 = vld [vmem:[#allocation2 + $0x290] sm:$0xff]
    %v489 = vld [vmem:[#allocation2 + $0x298] sm:$0xff]
    %v490 = vld [vmem:[#allocation2 + $0x2a0] sm:$0xff]
    %v491 = vld [vmem:[#allocation2 + $0x2a8] sm:$0xff]
    %v492 = vld [vmem:[#allocation2 + $0x2b0] sm:$0xff]
    %v493 = vld [vmem:[#allocation2 + $0x2b8] sm:$0xff]
    %v494 = vld [vmem:[#allocation2 + $0x2c0] sm:$0xff]
    %v495 = vld [vmem:[#allocation2 + $0x2c8] sm:$0xff]
    %v496 = vld [vmem:[#allocation2 + $0x2d0] sm:$0xff]
    %v497 = vld [vmem:[#allocation2 + $0x2d8] sm:$0xff]
    %v498 = vld [vmem:[#allocation2 + $0x2e0] sm:$0xff]
    %v499 = vld [vmem:[#allocation2 + $0x2e8] sm:$0xff]
    %v500 = vld [vmem:[#allocation2 + $0x2f0] sm:$0xff]
    %v501 = vld [vmem:[#allocation2 + $0x2f8] sm:$0xff]
    %v502 = vld [vmem:[#allocation2 + $0x300] sm:$0xff]
    %v503 = vld [vmem:[#allocation2 + $0x308] sm:$0xff]
    %v504 = vld [vmem:[#allocation2 + $0x310] sm:$0xff]
    %v505 = vld [vmem:[#allocation2 + $0x318] sm:$0xff]
    %v506 = vld [vmem:[#allocation2 + $0x320] sm:$0xff]
    %v507 = vld [vmem:[#allocation2 + $0x328] sm:$0xff]
    %v508 = vld [vmem:[#allocation2 + $0x330] sm:$0xff]
    %v509 = vld [vmem:[#allocation2 + $0x338] sm:$0xff]
    %v510 = vld [vmem:[#allocation2 + $0x340] sm:$0xff]
    %v511 = vld [vmem:[#allocation2 + $0x348] sm:$0xff]
    %v512 = vld [vmem:[#allocation2 + $0x350] sm:$0xff]
    %v513 = vld [vmem:[#allocation2 + $0x358] sm:$0xff]
    %v514 = vld [vmem:[#allocation2 + $0x360] sm:$0xff]
    %v515 = vld [vmem:[#allocation2 + $0x368] sm:$0xff]
    %v516 = vld [vmem:[#allocation2 + $0x370] sm:$0xff]
    %v517 = vld [vmem:[#allocation2 + $0x378] sm:$0xff]
    %v518 = vld [vmem:[#allocation2 + $0x380] sm:$0xff]
    %v519 = vld [vmem:[#allocation2 + $0x388] sm:$0xff]
    %v520 = vld [vmem:[#allocation2 + $0x390] sm:$0xff]
    %v521 = vld [vmem:[#allocation2 + $0x398] sm:$0xff]
    %v522 = vld [vmem:[#allocation2 + $0x3a0] sm:$0xff]
    %v523 = vld [vmem:[#allocation2 + $0x3a8] sm:$0xff]
    %v524 = vld [vmem:[#allocation2 + $0x3b0] sm:$0xff]
    %v525 = vld [vmem:[#allocation2 + $0x3b8] sm:$0xff]
    %v526 = vld [vmem:[#allocation2 + $0x3c0] sm:$0xff]
    %v527 = vld [vmem:[#allocation2 + $0x3c8] sm:$0xff]
    %v528 = vld [vmem:[#allocation2 + $0x3d0] sm:$0xff]
    %v529 = vld [vmem:[#allocation2 + $0x3d8] sm:$0xff]
    %v530 = vld [vmem:[#allocation2 + $0x3e0] sm:$0xff]
    %v531 = vld [vmem:[#allocation2 + $0x3e8] sm:$0xff]
    %v532 = vld [vmem:[#allocation2 + $0x3f0] sm:$0xff]
    %v533 = vld [vmem:[#allocation2 + $0x3f8] sm:$0xff]
    %v534 = vld [vmem:[#allocation2 + $0x400] sm:$0xff]
    %v535 = vld [vmem:[#allocation2 + $0x408] sm:$0xff]
    %v536 = vld [vmem:[#allocation2 + $0x410] sm:$0xff]
    %v537 = vld [vmem:[#allocation2 + $0x418] sm:$0xff]
    %v538 = vld [vmem:[#allocation2 + $0x420] sm:$0xff]
    %v539 = vld [vmem:[#allocation2 + $0x428] sm:$0xff]
    %v540 = vld [vmem:[#allocation2 + $0x430] sm:$0xff]
    %v541 = vld [vmem:[#allocation2 + $0x438] sm:$0xff]
    %v542 = vld [vmem:[#allocation2 + $0x440] sm:$0xff]
    %v543 = vld [vmem:[#allocation2 + $0x448] sm:$0xff]
    %v544 = vld [vmem:[#allocation2 + $0x450] sm:$0xff]
    %v545 = vld [vmem:[#allocation2 + $0x458] sm:$0xff]
    %v546 = vld [vmem:[#allocation2 + $0x460] sm:$0xff]
    %v547 = vld [vmem:[#allocation2 + $0x468] sm:$0xff]
    %v548 = vld [vmem:[#allocation2 + $0x470] sm:$0xff]
    %v549 = vld [vmem:[#allocation2 + $0x478] sm:$0xff]
    %v550 = vld [vmem:[#allocation2 + $0x480] sm:$0xff]
    %v551 = vld [vmem:[#allocation2 + $0x488] sm:$0xff]
    %v552 = vld [vmem:[#allocation2 + $0x490] sm:$0xff]
    %v553 = vld [vmem:[#allocation2 + $0x498] sm:$0xff]
    %v554 = vld [vmem:[#allocation2 + $0x4a0] sm:$0xff]
    %v555 = vld [vmem:[#allocation2 + $0x4a8] sm:$0xff]
    %v556 = vld [vmem:[#allocation2 + $0x4b0] sm:$0xff]
    %v557 = vld [vmem:[#allocation2 + $0x4b8] sm:$0xff]
    %v558 = vld [vmem:[#allocation2 + $0x4c0] sm:$0xff]
    %v559 = vld [vmem:[#allocation2 + $0x4c8] sm:$0xff]
    %v560 = vld [vmem:[#allocation2 + $0x4d0] sm:$0xff]
    %v561 = vld [vmem:[#allocation2 + $0x4d8] sm:$0xff]
    %v562 = vld [vmem:[#allocation2 + $0x4e0] sm:$0xff]
    %v563 = vld [vmem:[#allocation2 + $0x4e8] sm:$0xff]
    %v564 = vld [vmem:[#allocation2 + $0x4f0] sm:$0xff]
    %v565 = vld [vmem:[#allocation2 + $0x4f8] sm:$0xff]
    %v566 = vld [vmem:[#allocation2 + $0x500] sm:$0xff]
    %v567 = vld [vmem:[#allocation2 + $0x508] sm:$0xff]
    %v568 = vld [vmem:[#allocation2 + $0x510] sm:$0xff]
    %v569 = vld [vmem:[#allocation2 + $0x518] sm:$0xff]
    %v570 = vld [vmem:[#allocation2 + $0x520] sm:$0xff]
    %v571 = vld [vmem:[#allocation2 + $0x528] sm:$0xff]
    %v572 = vld [vmem:[#allocation2 + $0x530] sm:$0xff]
    %v573 = vld [vmem:[#allocation2 + $0x538] sm:$0xff]
    %v574 = vld [vmem:[#allocation2 + $0x540] sm:$0xff]
    %v575 = vld [vmem:[#allocation2 + $0x548] sm:$0xff]
    %v576 = vld [vmem:[#allocation2 + $0x550] sm:$0xff]
    %v577 = vld [vmem:[#allocation2 + $0x558] sm:$0xff]
    %v578 = vld [vmem:[#allocation2 + $0x560] sm:$0xff]
    %v579 = vld [vmem:[#allocation2 + $0x568] sm:$0xff]
    %v580 = vld [vmem:[#allocation2 + $0x570] sm:$0xff]
    %v581 = vld [vmem:[#allocation2 + $0x578] sm:$0xff]
    %v582 = vld [vmem:[#allocation2 + $0x580] sm:$0xff]
    %v583 = vld [vmem:[#allocation2 + $0x588] sm:$0xff]
    %v584 = vld [vmem:[#allocation2 + $0x590] sm:$0xff]
    %v585 = vld [vmem:[#allocation2 + $0x598] sm:$0xff]
    %v586 = vld [vmem:[#allocation2 + $0x5a0] sm:$0xff]
    %v587 = vld [vmem:[#allocation2 + $0x5a8] sm:$0xff]
    %v588 = vld [vmem:[#allocation2 + $0x5b0] sm:$0xff]
    %v589 = vld [vmem:[#allocation2 + $0x5b8] sm:$0xff]
    %v590 = vld [vmem:[#allocation2 + $0x5c0] sm:$0xff]
    %v591 = vld [vmem:[#allocation2 + $0x5c8] sm:$0xff]
    %v592 = vld [vmem:[#allocation2 + $0x5d0] sm:$0xff]
    %v593 = vld [vmem:[#allocation2 + $0x5d8] sm:$0xff]
    %v594 = vld [vmem:[#allocation2 + $0x5e0] sm:$0xff]
    %v595 = vld [vmem:[#allocation2 + $0x5e8] sm:$0xff]
    %v596 = vld [vmem:[#allocation2 + $0x5f0] sm:$0xff]
    %v597 = vld [vmem:[#allocation2 + $0x5f8] sm:$0xff]
    %v598 = vld [vmem:[#allocation2 + $0x600] sm:$0xff]
    %v599 = vld [vmem:[#allocation2 + $0x608] sm:$0xff]
    %v600 = vld [vmem:[#allocation2 + $0x610] sm:$0xff]
    %v601 = vld [vmem:[#allocation2 + $0x618] sm:$0xff]
    %v602 = vld [vmem:[#allocation2 + $0x620] sm:$0xff]
    %v603 = vld [vmem:[#allocation2 + $0x628] sm:$0xff]
    %v604 = vld [vmem:[#allocation2 + $0x630] sm:$0xff]
    %v605 = vld [vmem:[#allocation2 + $0x638] sm:$0xff]
    %v606 = vld [vmem:[#allocation2 + $0x640] sm:$0xff]
    %v607 = vld [vmem:[#allocation2 + $0x648] sm:$0xff]
    %v608 = vld [vmem:[#allocation2 + $0x650] sm:$0xff]
    %v609 = vld [vmem:[#allocation2 + $0x658] sm:$0xff]
    %v610 = vld [vmem:[#allocation2 + $0x660] sm:$0xff]
    %v611 = vld [vmem:[#allocation2 + $0x668] sm:$0xff]
    %v612 = vld [vmem:[#allocation2 + $0x670] sm:$0xff]
    %v613 = vld [vmem:[#allocation2 + $0x678] sm:$0xff]
    %v614 = vld [vmem:[#allocation2 + $0x680] sm:$0xff]
    %v615 = vld [vmem:[#allocation2 + $0x688] sm:$0xff]
    %v616 = vld [vmem:[#allocation2 + $0x690] sm:$0xff]
    %v617 = vld [vmem:[#allocation2 + $0x698] sm:$0xff]
    %v618 = vld [vmem:[#allocation2 + $0x6a0] sm:$0xff]
    %v619 = vld [vmem:[#allocation2 + $0x6a8] sm:$0xff]
    %v620 = vld [vmem:[#allocation2 + $0x6b0] sm:$0xff]
    %v621 = vld [vmem:[#allocation2 + $0x6b8] sm:$0xff]
    %v622 = vld [vmem:[#allocation2 + $0x6c0] sm:$0xff]
    %v623 = vld [vmem:[#allocation2 + $0x6c8] sm:$0xff]
    %v624 = vld [vmem:[#allocation2 + $0x6d0] sm:$0xff]
    %v625 = vld [vmem:[#allocation2 + $0x6d8] sm:$0xff]
    %v626 = vld [vmem:[#allocation2 + $0x6e0] sm:$0xff]
    %v627 = vld [vmem:[#allocation2 + $0x6e8] sm:$0xff]
    %v628 = vld [vmem:[#allocation2 + $0x6f0] sm:$0xff]
    %v629 = vld [vmem:[#allocation2 + $0x6f8] sm:$0xff]
    %v630 = vld [vmem:[#allocation2 + $0x700] sm:$0xff]
    %v631 = vld [vmem:[#allocation2 + $0x708] sm:$0xff]
    %v632 = vld [vmem:[#allocation2 + $0x710] sm:$0xff]
    %v633 = vld [vmem:[#allocation2 + $0x718] sm:$0xff]
    %v634 = vld [vmem:[#allocation2 + $0x720] sm:$0xff]
    %v635 = vld [vmem:[#allocation2 + $0x728] sm:$0xff]
    %v636 = vld [vmem:[#allocation2 + $0x730] sm:$0xff]
    %v637 = vld [vmem:[#allocation2 + $0x738] sm:$0xff]
    %v638 = vld [vmem:[#allocation2 + $0x740] sm:$0xff]
    %v639 = vld [vmem:[#allocation2 + $0x748] sm:$0xff]
    %v640 = vld [vmem:[#allocation2 + $0x750] sm:$0xff]
    %v641 = vld [vmem:[#allocation2 + $0x758] sm:$0xff]
    %v642 = vld [vmem:[#allocation2 + $0x760] sm:$0xff]
    %v643 = vld [vmem:[#allocation2 + $0x768] sm:$0xff]
    %v644 = vld [vmem:[#allocation2 + $0x770] sm:$0xff]
    %v645 = vld [vmem:[#allocation2 + $0x778] sm:$0xff]
    %v646 = vld [vmem:[#allocation2 + $0x780] sm:$0xff]
    %v647 = vld [vmem:[#allocation2 + $0x788] sm:$0xff]
    %v648 = vld [vmem:[#allocation2 + $0x790] sm:$0xff]
    %v649 = vld [vmem:[#allocation2 + $0x798] sm:$0xff]
    %v650 = vld [vmem:[#allocation2 + $0x7a0] sm:$0xff]
    %v651 = vld [vmem:[#allocation2 + $0x7a8] sm:$0xff]
    %v652 = vld [vmem:[#allocation2 + $0x7b0] sm:$0xff]
    %v653 = vld [vmem:[#allocation2 + $0x7b8] sm:$0xff]
    %v654 = vld [vmem:[#allocation2 + $0x7c0] sm:$0xff]
    %v655 = vld [vmem:[#allocation2 + $0x7c8] sm:$0xff]
    %v656 = vld [vmem:[#allocation2 + $0x7d0] sm:$0xff]
    %v657 = vld [vmem:[#allocation2 + $0x7d8] sm:$0xff]
    %v658 = vld [vmem:[#allocation2 + $0x7e0] sm:$0xff]
    %v659 = vld [vmem:[#allocation2 + $0x7e8] sm:$0xff]
    %v660 = vld [vmem:[#allocation2 + $0x7f0] sm:$0xff]
    %v661 = vld [vmem:[#allocation2 + $0x7f8] sm:$0xff]
    %v662 = vld [vmem:[%s4] sm:$0x3]
    %v664 = vlaneseq
    %v665 = vshrl.u32 %v664, 7
    %v666 = vsub.s32 0, %v665
    %v667 = vrot.slane %v662, %v666
    %v668 = vlaneseq
    %v669 = vshrl.u32 %v668, 7
    %v670 = vsub.s32 1, %v669
    %v671 = vrot.slane %v662, %v670
    %674 = vmatprep.subr.mxu0 %v407
    %675 = vmatpush1.msra.mxu0 %v406
    %676 = vmatprep.subr.mxu0 %v409
    %677 = vmatpush1.msra.mxu0 %v408
    %678 = vmatprep.subr.mxu0 %v411
    %679 = vmatpush1.msra.mxu0 %v410
    %680 = vmatprep.subr.mxu0 %v413
    %681 = vmatpush1.msra.mxu0 %v412
    %682 = vmatprep.subr.mxu0 %v415
    %683 = vmatpush1.msra.mxu0 %v414
    %684 = vmatprep.subr.mxu0 %v417
    %685 = vmatpush1.msra.mxu0 %v416
    %686 = vmatprep.subr.mxu0 %v419
    %687 = vmatpush1.msra.mxu0 %v418
    %688 = vmatprep.subr.mxu0 %v421
    %689 = vmatpush1.msra.mxu0 %v420
    %690 = vmatprep.subr.mxu0 %v423
    %691 = vmatpush1.msra.mxu0 %v422
    %692 = vmatprep.subr.mxu0 %v425
    %693 = vmatpush1.msra.mxu0 %v424
    %694 = vmatprep.subr.mxu0 %v427
    %695 = vmatpush1.msra.mxu0 %v426
    %696 = vmatprep.subr.mxu0 %v429
    %697 = vmatpush1.msra.mxu0 %v428
    %698 = vmatprep.subr.mxu0 %v431
    %699 = vmatpush1.msra.mxu0 %v430
    %700 = vmatprep.subr.mxu0 %v433
    %701 = vmatpush1.msra.mxu0 %v432
    %702 = vmatprep.subr.mxu0 %v435
    %703 = vmatpush1.msra.mxu0 %v434
    %704 = vmatprep.subr.mxu0 %v437
    %705 = vmatpush1.msra.mxu0 %v436
    %706 = vmatprep.subr.mxu0 %v439
    %707 = vmatpush1.msra.mxu0 %v438
    %708 = vmatprep.subr.mxu0 %v441
    %709 = vmatpush1.msra.mxu0 %v440
    %710 = vmatprep.subr.mxu0 %v443
    %711 = vmatpush1.msra.mxu0 %v442
    %712 = vmatprep.subr.mxu0 %v445
    %713 = vmatpush1.msra.mxu0 %v444
    %714 = vmatprep.subr.mxu0 %v447
    %715 = vmatpush1.msra.mxu0 %v446
    %716 = vmatprep.subr.mxu0 %v449
    %717 = vmatpush1.msra.mxu0 %v448
    %718 = vmatprep.subr.mxu0 %v451
    %719 = vmatpush1.msra.mxu0 %v450
    %720 = vmatprep.subr.mxu0 %v453
    %721 = vmatpush1.msra.mxu0 %v452
    %722 = vmatprep.subr.mxu0 %v455
    %723 = vmatpush1.msra.mxu0 %v454
    %724 = vmatprep.subr.mxu0 %v457
    %725 = vmatpush1.msra.mxu0 %v456
    %726 = vmatprep.subr.mxu0 %v459
    %727 = vmatpush1.msra.mxu0 %v458
    %728 = vmatprep.subr.mxu0 %v461
    %729 = vmatpush1.msra.mxu0 %v460
    %730 = vmatprep.subr.mxu0 %v463
    %731 = vmatpush1.msra.mxu0 %v462
    %732 = vmatprep.subr.mxu0 %v465
    %733 = vmatpush1.msra.mxu0 %v464
    %734 = vmatprep.subr.mxu0 %v467
    %735 = vmatpush1.msra.mxu0 %v466
    %736 = vmatprep.subr.mxu0 %v469
    %737 = vmatpush1.msra.mxu0 %v468
    %738 = vmatprep.mubr.f32.mxu0 %v399
    %739 = vmatmul.mubr.f32.gmra.mrb[0].mxu0 %v398
    %v740 = vpop.f32.mrb[0].mxu0
    %v741 = vadd.f32 %v667, %v740
    %v742 = vpop.f32.mrb[0].mxu0
    %v743 = vadd.f32 %v671, %v742
    %744 = vdwg.mxu0
    %745 = vmatprep.subr.mxu0 %v471
    %746 = vmatpush1.msra.mxu0 %v470
    %747 = vmatprep.subr.mxu0 %v473
    %748 = vmatpush1.msra.mxu0 %v472
    %749 = vmatprep.subr.mxu0 %v475
    %750 = vmatpush1.msra.mxu0 %v474
    %751 = vmatprep.subr.mxu0 %v477
    %752 = vmatpush1.msra.mxu0 %v476
    %753 = vmatprep.subr.mxu0 %v479
    %754 = vmatpush1.msra.mxu0 %v478
    %755 = vmatprep.subr.mxu0 %v481
    %756 = vmatpush1.msra.mxu0 %v480
    %757 = vmatprep.subr.mxu0 %v483
    %758 = vmatpush1.msra.mxu0 %v482
    %759 = vmatprep.subr.mxu0 %v485
    %760 = vmatpush1.msra.mxu0 %v484
    %761 = vmatprep.subr.mxu0 %v487
    %762 = vmatpush1.msra.mxu0 %v486
    %763 = vmatprep.subr.mxu0 %v489
    %764 = vmatpush1.msra.mxu0 %v488
    %765 = vmatprep.subr.mxu0 %v491
    %766 = vmatpush1.msra.mxu0 %v490
    %767 = vmatprep.subr.mxu0 %v493
    %768 = vmatpush1.msra.mxu0 %v492
    %769 = vmatprep.subr.mxu0 %v495
    %770 = vmatpush1.msra.mxu0 %v494
    %771 = vmatprep.subr.mxu0 %v497
    %772 = vmatpush1.msra.mxu0 %v496
    %773 = vmatprep.subr.mxu0 %v499
    %774 = vmatpush1.msra.mxu0 %v498
    %775 = vmatprep.subr.mxu0 %v501
    %776 = vmatpush1.msra.mxu0 %v500
    %777 = vmatprep.subr.mxu0 %v503
    %778 = vmatpush1.msra.mxu0 %v502
    %779 = vmatprep.subr.mxu0 %v505
    %780 = vmatpush1.msra.mxu0 %v504
    %781 = vmatprep.subr.mxu0 %v507
    %782 = vmatpush1.msra.mxu0 %v506
    %783 = vmatprep.subr.mxu0 %v509
    %784 = vmatpush1.msra.mxu0 %v508
    %785 = vmatprep.subr.mxu0 %v511
    %786 = vmatpush1.msra.mxu0 %v510
    %787 = vmatprep.subr.mxu0 %v513
    %788 = vmatpush1.msra.mxu0 %v512
    %789 = vmatprep.subr.mxu0 %v515
    %790 = vmatpush1.msra.mxu0 %v514
    %791 = vmatprep.subr.mxu0 %v517
    %792 = vmatpush1.msra.mxu0 %v516
    %793 = vmatprep.subr.mxu0 %v519
    %794 = vmatpush1.msra.mxu0 %v518
    %795 = vmatprep.subr.mxu0 %v521
    %796 = vmatpush1.msra.mxu0 %v520
    %797 = vmatprep.subr.mxu0 %v523
    %798 = vmatpush1.msra.mxu0 %v522
    %799 = vmatprep.subr.mxu0 %v525
    %800 = vmatpush1.msra.mxu0 %v524
    %801 = vmatprep.subr.mxu0 %v527
    %802 = vmatpush1.msra.mxu0 %v526
    %803 = vmatprep.subr.mxu0 %v529
    %804 = vmatpush1.msra.mxu0 %v528
    %805 = vmatprep.subr.mxu0 %v531
    %806 = vmatpush1.msra.mxu0 %v530
    %807 = vmatprep.subr.mxu0 %v533
    %808 = vmatpush1.msra.mxu0 %v532
    %809 = vmatprep.mubr.f32.mxu0 %v401
    %810 = vmatmul.mubr.f32.gmra.mrb[0].mxu0 %v400
    %v811 = vpop.f32.mrb[0].mxu0
    %v812 = vadd.f32 %v741, %v811
    %v813 = vpop.f32.mrb[0].mxu0
    %v814 = vadd.f32 %v743, %v813
    %815 = vdwg.mxu0
    %816 = vmatprep.subr.mxu0 %v535
    %817 = vmatpush1.msra.mxu0 %v534
    %818 = vmatprep.subr.mxu0 %v537
    %819 = vmatpush1.msra.mxu0 %v536
    %820 = vmatprep.subr.mxu0 %v539
    %821 = vmatpush1.msra.mxu0 %v538
    %822 = vmatprep.subr.mxu0 %v541
    %823 = vmatpush1.msra.mxu0 %v540
    %824 = vmatprep.subr.mxu0 %v543
    %825 = vmatpush1.msra.mxu0 %v542
    %826 = vmatprep.subr.mxu0 %v545
    %827 = vmatpush1.msra.mxu0 %v544
    %828 = vmatprep.subr.mxu0 %v547
    %829 = vmatpush1.msra.mxu0 %v546
    %830 = vmatprep.subr.mxu0 %v549
    %831 = vmatpush1.msra.mxu0 %v548
    %832 = vmatprep.subr.mxu0 %v551
    %833 = vmatpush1.msra.mxu0 %v550
    %834 = vmatprep.subr.mxu0 %v553
    %835 = vmatpush1.msra.mxu0 %v552
    %836 = vmatprep.subr.mxu0 %v555
    %837 = vmatpush1.msra.mxu0 %v554
    %838 = vmatprep.subr.mxu0 %v557
    %839 = vmatpush1.msra.mxu0 %v556
    %840 = vmatprep.subr.mxu0 %v559
    %841 = vmatpush1.msra.mxu0 %v558
    %842 = vmatprep.subr.mxu0 %v561
    %843 = vmatpush1.msra.mxu0 %v560
    %844 = vmatprep.subr.mxu0 %v563
    %845 = vmatpush1.msra.mxu0 %v562
    %846 = vmatprep.subr.mxu0 %v565
    %847 = vmatpush1.msra.mxu0 %v564
    %848 = vmatprep.subr.mxu0 %v567
    %849 = vmatpush1.msra.mxu0 %v566
    %850 = vmatprep.subr.mxu0 %v569
    %851 = vmatpush1.msra.mxu0 %v568
    %852 = vmatprep.subr.mxu0 %v571
    %853 = vmatpush1.msra.mxu0 %v570
    %854 = vmatprep.subr.mxu0 %v573
    %855 = vmatpush1.msra.mxu0 %v572
    %856 = vmatprep.subr.mxu0 %v575
    %857 = vmatpush1.msra.mxu0 %v574
    %858 = vmatprep.subr.mxu0 %v577
    %859 = vmatpush1.msra.mxu0 %v576
    %860 = vmatprep.subr.mxu0 %v579
    %861 = vmatpush1.msra.mxu0 %v578
    %862 = vmatprep.subr.mxu0 %v581
    %863 = vmatpush1.msra.mxu0 %v580
    %864 = vmatprep.subr.mxu0 %v583
    %865 = vmatpush1.msra.mxu0 %v582
    %866 = vmatprep.subr.mxu0 %v585
    %867 = vmatpush1.msra.mxu0 %v584
    %868 = vmatprep.subr.mxu0 %v587
    %869 = vmatpush1.msra.mxu0 %v586
    %870 = vmatprep.subr.mxu0 %v589
    %871 = vmatpush1.msra.mxu0 %v588
    %872 = vmatprep.subr.mxu0 %v591
    %873 = vmatpush1.msra.mxu0 %v590
    %874 = vmatprep.subr.mxu0 %v593
    %875 = vmatpush1.msra.mxu0 %v592
    %876 = vmatprep.subr.mxu0 %v595
    %877 = vmatpush1.msra.mxu0 %v594
    %878 = vmatprep.subr.mxu0 %v597
    %879 = vmatpush1.msra.mxu0 %v596
    %880 = vmatprep.mubr.f32.mxu0 %v403
    %881 = vmatmul.mubr.f32.gmra.mrb[0].mxu0 %v402
    %v882 = vpop.f32.mrb[0].mxu0
    %v883 = vadd.f32 %v812, %v882
    %v884 = vpop.f32.mrb[0].mxu0
    %v885 = vadd.f32 %v814, %v884
    %886 = vdwg.mxu0
    %887 = vmatprep.subr.mxu0 %v599
    %888 = vmatpush1.msra.mxu0 %v598
    %889 = vmatprep.subr.mxu0 %v601
    %890 = vmatpush1.msra.mxu0 %v600
    %891 = vmatprep.subr.mxu0 %v603
    %892 = vmatpush1.msra.mxu0 %v602
    %893 = vmatprep.subr.mxu0 %v605
    %894 = vmatpush1.msra.mxu0 %v604
    %895 = vmatprep.subr.mxu0 %v607
    %896 = vmatpush1.msra.mxu0 %v606
    %897 = vmatprep.subr.mxu0 %v609
    %898 = vmatpush1.msra.mxu0 %v608
    %899 = vmatprep.subr.mxu0 %v611
    %900 = vmatpush1.msra.mxu0 %v610
    %901 = vmatprep.subr.mxu0 %v613
    %902 = vmatpush1.msra.mxu0 %v612
    %903 = vmatprep.subr.mxu0 %v615
    %904 = vmatpush1.msra.mxu0 %v614
    %905 = vmatprep.subr.mxu0 %v617
    %906 = vmatpush1.msra.mxu0 %v616
    %907 = vmatprep.subr.mxu0 %v619
    %908 = vmatpush1.msra.mxu0 %v618
    %909 = vmatprep.subr.mxu0 %v621
    %910 = vmatpush1.msra.mxu0 %v620
    %911 = vmatprep.subr.mxu0 %v623
    %912 = vmatpush1.msra.mxu0 %v622
    %913 = vmatprep.subr.mxu0 %v625
    %914 = vmatpush1.msra.mxu0 %v624
    %915 = vmatprep.subr.mxu0 %v627
    %916 = vmatpush1.msra.mxu0 %v626
    %917 = vmatprep.subr.mxu0 %v629
    %918 = vmatpush1.msra.mxu0 %v628
    %919 = vmatprep.subr.mxu0 %v631
    %920 = vmatpush1.msra.mxu0 %v630
    %921 = vmatprep.subr.mxu0 %v633
    %922 = vmatpush1.msra.mxu0 %v632
    %923 = vmatprep.subr.mxu0 %v635
    %924 = vmatpush1.msra.mxu0 %v634
    %925 = vmatprep.subr.mxu0 %v637
    %926 = vmatpush1.msra.mxu0 %v636
    %927 = vmatprep.subr.mxu0 %v639
    %928 = vmatpush1.msra.mxu0 %v638
    %929 = vmatprep.subr.mxu0 %v641
    %930 = vmatpush1.msra.mxu0 %v640
    %931 = vmatprep.subr.mxu0 %v643
    %932 = vmatpush1.msra.mxu0 %v642
    %933 = vmatprep.subr.mxu0 %v645
    %934 = vmatpush1.msra.mxu0 %v644
    %935 = vmatprep.subr.mxu0 %v647
    %936 = vmatpush1.msra.mxu0 %v646
    %937 = vmatprep.subr.mxu0 %v649
    %938 = vmatpush1.msra.mxu0 %v648
    %939 = vmatprep.subr.mxu0 %v651
    %940 = vmatpush1.msra.mxu0 %v650
    %941 = vmatprep.subr.mxu0 %v653
    %942 = vmatpush1.msra.mxu0 %v652
    %943 = vmatprep.subr.mxu0 %v655
    %944 = vmatpush1.msra.mxu0 %v654
    %945 = vmatprep.subr.mxu0 %v657
    %946 = vmatpush1.msra.mxu0 %v656
    %947 = vmatprep.subr.mxu0 %v659
    %948 = vmatpush1.msra.mxu0 %v658
    %949 = vmatprep.subr.mxu0 %v661
    %950 = vmatpush1.msra.mxu0 %v660
    %951 = vmatprep.mubr.f32.mxu0 %v405
    %952 = vmatmul.mubr.f32.gmra.mrb[0].mxu0 %v404
    %v953 = vpop.f32.mrb[0].mxu0
    %v954 = vadd.f32 %v883, %v953
    %v955 = vpop.f32.mrb[0].mxu0
    %v956 = vadd.f32 %v885, %v955
    %957 = vdwg.mxu0
    %v958 = vmax.f32 %v954, 0.0
    %v959 = vmax.f32 %v956, 0.0
    %v960 = vld [vmem:[%s5] sm:$0xff]
    %v961 = vld [vmem:[%s5 + $0x8] sm:$0xff]
    %v962 = vld [vmem:[%s5 + $0x10] sm:$0xff]
    %v963 = vld [vmem:[%s5 + $0x18] sm:$0xff]
    %v964 = vld [vmem:[%s5 + $0x20] sm:$0xff]
    %v965 = vld [vmem:[%s5 + $0x28] sm:$0xff]
    %v966 = vld [vmem:[%s5 + $0x30] sm:$0xff]
    %v967 = vld [vmem:[%s5 + $0x38] sm:$0xff]
    %v968 = vld [vmem:[%s5 + $0x40] sm:$0xff]
    %v969 = vld [vmem:[%s5 + $0x48] sm:$0xff]
    %v970 = vld [vmem:[%s5 + $0x50] sm:$0xff]
    %v971 = vld [vmem:[%s5 + $0x58] sm:$0xff]
    %v972 = vld [vmem:[%s5 + $0x60] sm:$0xff]
    %v973 = vld [vmem:[%s5 + $0x68] sm:$0xff]
    %v974 = vld [vmem:[%s5 + $0x70] sm:$0xff]
    %v975 = vld [vmem:[%s5 + $0x78] sm:$0xff]
    %v976 = vld [vmem:[%s5 + $0x80] sm:$0xff]
    %v977 = vld [vmem:[%s5 + $0x88] sm:$0xff]
    %v978 = vld [vmem:[%s5 + $0x90] sm:$0xff]
    %v979 = vld [vmem:[%s5 + $0x98] sm:$0xff]
    %v980 = vld [vmem:[%s5 + $0xa0] sm:$0xff]
    %v981 = vld [vmem:[%s5 + $0xa8] sm:$0xff]
    %v982 = vld [vmem:[%s5 + $0xb0] sm:$0xff]
    %v983 = vld [vmem:[%s5 + $0xb8] sm:$0xff]
    %v984 = vld [vmem:[%s5 + $0xc0] sm:$0xff]
    %v985 = vld [vmem:[%s5 + $0xc8] sm:$0xff]
    %v986 = vld [vmem:[%s5 + $0xd0] sm:$0xff]
    %v987 = vld [vmem:[%s5 + $0xd8] sm:$0xff]
    %v988 = vld [vmem:[%s5 + $0xe0] sm:$0xff]
    %v989 = vld [vmem:[%s5 + $0xe8] sm:$0xff]
    %v990 = vld [vmem:[%s5 + $0xf0] sm:$0xff]
    %v991 = vld [vmem:[%s5 + $0xf8] sm:$0xff]
    %992 = vmatprep.subr.mxu0 0.0
    %993 = vmatpush1.msra.mxu0 %v960
    %994 = vmatprep.subr.mxu0 0.0
    %995 = vmatpush1.msra.mxu0 %v961
    %996 = vmatprep.subr.mxu0 0.0
    %997 = vmatpush1.msra.mxu0 %v962
    %998 = vmatprep.subr.mxu0 0.0
    %999 = vmatpush1.msra.mxu0 %v963
    %1000 = vmatprep.subr.mxu0 0.0
    %1001 = vmatpush1.msra.mxu0 %v964
    %1002 = vmatprep.subr.mxu0 0.0
    %1003 = vmatpush1.msra.mxu0 %v965
    %1004 = vmatprep.subr.mxu0 0.0
    %1005 = vmatpush1.msra.mxu0 %v966
    %1006 = vmatprep.subr.mxu0 0.0
    %1007 = vmatpush1.msra.mxu0 %v967
    %1008 = vmatprep.subr.mxu0 0.0
    %1009 = vmatpush1.msra.mxu0 %v968
    %1010 = vmatprep.subr.mxu0 0.0
    %1011 = vmatpush1.msra.mxu0 %v969
    %1012 = vmatprep.subr.mxu0 0.0
    %1013 = vmatpush1.msra.mxu0 %v970
    %1014 = vmatprep.subr.mxu0 0.0
    %1015 = vmatpush1.msra.mxu0 %v971
    %1016 = vmatprep.subr.mxu0 0.0
    %1017 = vmatpush1.msra.mxu0 %v972
    %1018 = vmatprep.subr.mxu0 0.0
    %1019 = vmatpush1.msra.mxu0 %v973
    %1020 = vmatprep.subr.mxu0 0.0
    %1021 = vmatpush1.msra.mxu0 %v974
    %1022 = vmatprep.subr.mxu0 0.0
    %1023 = vmatpush1.msra.mxu0 %v975
    %1024 = vmatprep.subr.mxu0 0.0
    %1025 = vmatpush1.msra.mxu0 %v976
    %1026 = vmatprep.subr.mxu0 0.0
    %1027 = vmatpush1.msra.mxu0 %v977
    %1028 = vmatprep.subr.mxu0 0.0
    %1029 = vmatpush1.msra.mxu0 %v978
    %1030 = vmatprep.subr.mxu0 0.0
    %1031 = vmatpush1.msra.mxu0 %v979
    %1032 = vmatprep.subr.mxu0 0.0
    %1033 = vmatpush1.msra.mxu0 %v980
    %1034 = vmatprep.subr.mxu0 0.0
    %1035 = vmatpush1.msra.mxu0 %v981
    %1036 = vmatprep.subr.mxu0 0.0
    %1037 = vmatpush1.msra.mxu0 %v982
    %1038 = vmatprep.subr.mxu0 0.0
    %1039 = vmatpush1.msra.mxu0 %v983
    %1040 = vmatprep.subr.mxu0 0.0
    %1041 = vmatpush1.msra.mxu0 %v984
    %1042 = vmatprep.subr.mxu0 0.0
    %1043 = vmatpush1.msra.mxu0 %v985
    %1044 = vmatprep.subr.mxu0 0.0
    %1045 = vmatpush1.msra.mxu0 %v986
    %1046 = vmatprep.subr.mxu0 0.0
    %1047 = vmatpush1.msra.mxu0 %v987
    %1048 = vmatprep.subr.mxu0 0.0
    %1049 = vmatpush1.msra.mxu0 %v988
    %1050 = vmatprep.subr.mxu0 0.0
    %1051 = vmatpush1.msra.mxu0 %v989
    %1052 = vmatprep.subr.mxu0 0.0
    %1053 = vmatpush1.msra.mxu0 %v990
    %1054 = vmatprep.subr.mxu0 0.0
    %1055 = vmatpush1.msra.mxu0 %v991
    %1056 = vmatprep.mubr.f32.mxu0 %v959
    %1057 = vmatmul.mubr.f32.gmra.mrb[0].mxu0 %v958
    %v1058 = vpop.f32.mrb[0].mxu0
    %v1059 = vadd.f32 0.0, %v1058
    %v1060 = vpop.f32.mrb[0].mxu0
    %1061 = vdwg.mxu0
    %vm1062 = vcmask 523264
    %1063 = vst.msk [vmem:[#allocation5] sm:$0xff] %vm1062, %v1059
    // Predicated region
    $region30: #{tpu_custom_call.1} parent=1 // pred_check
      _
    $region31: #{tpu_custom_call.1} parent=1 // pred_check_branch
      %1065 = sbr.rel (0) target = $region33
    $region32: #{tpu_custom_call.1} parent=1 // pred_region
      %s1067 = ssub.s32 128, 128
      %1068 = vsyncadd [#allocation4], %s1067
      %s1070 = sshll.u32 [#allocation5], 4
      %s1071 = int_to_ptr.vmem [resolvable:$true] %s1070
      %1073 = dma.vmem_to_hbm [thread:$0]  %s1071, 128, %s6, [#allocation4]
    $region33: #{tpu_custom_call.1} parent=1 // pred_fallthru
      _
    // Predicated region
    $region34: #{tpu_custom_call.1} parent=1 // pred_check
      _
    $region35: #{tpu_custom_call.1} parent=1 // pred_check_branch
      %1075 = sbr.rel (0) target = $region37
    $region36: #{tpu_custom_call.1} parent=1 // pred_region
      %1076 = dma.done [#allocation4], 128
    $region37: #{tpu_custom_call.1} parent=1 // pred_fallthru
      _
    %1077 = vsyncpa [#allocation3], 1
    %1078 = vsyncpa [#allocation4], 1

</llo_original>
